<compile_context>
chip_gen: v7x
topology: tpu7x:2x2x1
jax: 0.10.0
libtpu: 0.0.40
codegen_flags: <defaults>
</compile_context>

<pallas_src>
import functools
from typing import NamedTuple

import jax
import jax.numpy as jnp
from jax.experimental import pallas as pl
from jax.experimental.pallas import tpu as pltpu


def _round_up(x, m):
    return ((x + m - 1) // m) * m


def _cdiv(a, b):
    return -(-a // b)


def _vmem_capacity_bytes():
    """Physical VMEM per TensorCore; falls back to v7x's 64 MiB if unknown."""
    try:
        info = pltpu.get_tpu_info()
        cap = int(getattr(info, "vmem_capacity_bytes", 0) or 0)
        if cap > 0:
            return cap
    except Exception:
        pass
    return 64 << 20


class PreparedAdapter(NamedTuple):
    w_cat: jax.Array   # [D_pad, 2*D_pad]  matmul dtype (old | new adapter, fused)
    b_cat: jax.Array   # [1, 2*D_pad]      f32 (added after f32 accumulation)
    text: jax.Array    # [D_pad, C_pad]    matmul dtype, L2-normalized, /temperature folded
    d: int
    c: int
    d_pad: int
    c_pad: int
    ebd_weight: float


def _multiple_adapter_kernel(feat_ref, w_cat_ref, b_cat_ref, text_ref, o_ref,
                             *, d_pad, ebd_weight):
    """One batch tile: fused (old|new) adapter GEMM -> L2 norm -> combine -> text GEMM."""
    x = feat_ref[...]                                         # [TB, D_pad]

    # Single MXU pass for BOTH adapters: [TB, D_pad] @ [D_pad, 2*D_pad], f32 acc.
    y = jnp.dot(x, w_cat_ref[...], preferred_element_type=jnp.float32)
    y = y + b_cat_ref[...].astype(jnp.float32)                # f32 broadcast bias add

    old = y[:, :d_pad]                                        # static, 128-aligned slices
    new = y[:, d_pad:]

    # L2 normalize along embedding dim; rsqrt goes to the EUP slot.
    # eps guards all-zero padded rows (no inf/NaN can enter the second matmul).
    eps = jnp.float32(1e-12)
    inv_old = jax.lax.rsqrt(jnp.sum(old * old, axis=-1, keepdims=True) + eps)
    inv_new = jax.lax.rsqrt(jnp.sum(new * new, axis=-1, keepdims=True) + eps)

    # image_features = w * normalize(old).detach() + (1-w) * normalize(new)
    # (detach affects gradients only; forward value identical)
    img = (ebd_weight * inv_old) * old + ((1.0 - ebd_weight) * inv_new) * new

    # Text arrives pre-normalized with 1/temperature already folded in.
    t = text_ref[...]
    o_ref[...] = jnp.dot(img.astype(t.dtype), t,
                         preferred_element_type=jnp.float32)


def prepare_multiple_adapter(w_old, b_old, w_new, b_new, text_features, *,
                             ebd_weight=0.5, temperature=0.01,
                             matmul_dtype=jnp.bfloat16):
    """One-time (cacheable) preprocessing of the adapter weights / text matrix.

    w_old, w_new:  [D, D] (laid out as x @ W, i.e. in->out)
    b_old, b_new:  [1, D]
    text_features: [D, C] un-normalized
    matmul_dtype:  jnp.bfloat16 (default, MXU fast path) or None (keep f32)
    """
    D = w_old.shape[0]
    C = text_features.shape[1]
    D_pad = _round_up(D, 128)
    C_pad = _round_up(C, 128)
    f32 = jnp.float32

    def _pad_w(w):
        return jnp.pad(w.astype(f32), ((0, D_pad - D), (0, D_pad - D)))

    def _pad_b(b):
        return jnp.pad(b.astype(f32).reshape(1, D), ((0, 0), (0, D_pad - D)))

    # Fused adapter weights / bias: [D_pad, 2*D_pad], [1, 2*D_pad].
    w_cat = jnp.concatenate([_pad_w(w_old), _pad_w(w_new)], axis=1)
    b_cat = jnp.concatenate([_pad_b(b_old), _pad_b(b_new)], axis=1)   # stays f32

    # Hoist text normalization (dim 0) + fold in 1/temperature (constant per call).
    t = text_features.astype(f32)
    t = t * jax.lax.rsqrt(jnp.sum(t * t, axis=0, keepdims=True))
    t = t * (1.0 / float(temperature))
    t = jnp.pad(t, ((0, D_pad - D), (0, C_pad - C)))                  # [D_pad, C_pad]

    if matmul_dtype is not None:
        w_cat = w_cat.astype(matmul_dtype)
        t = t.astype(matmul_dtype)

    return PreparedAdapter(w_cat=w_cat, b_cat=b_cat, text=t,
                           d=int(D), c=int(C), d_pad=int(D_pad), c_pad=int(C_pad),
                           ebd_weight=float(ebd_weight))


def multiple_adapter_apply(prepared, features, *, block_b=256):
    """Run the fused forward pass: features [B, D] -> logits [B, C] (f32)."""
    B, D = features.shape
    assert D == prepared.d, f"feature dim {D} != prepared dim {prepared.d}"
    D_pad, C_pad, C = prepared.d_pad, prepared.c_pad, prepared.c
    mm_dtype = prepared.w_cat.dtype
    isz = jnp.dtype(mm_dtype).itemsize

    # Sublane row multiple for the feature tile / MXU LHS: 16 for 16-bit
    # operands (two rows per sublane), 32 for 8-bit, 8 for f32.
    row_mult = 16 if isz == 2 else (32 if isz == 1 else 8)

    # Tile selection:
    #  * >= 2 grid steps when the batch is big enough, so the "parallel" batch
    #    axis can be sharded across v7x's two TensorCores,
    #  * TB sized to the batch (not blindly to block_b) so the last tile
    #    carries little zero-row padding.
    n_tiles = max(_cdiv(B, int(block_b)), 1)
    if B > 2 * row_mult:
        n_tiles = max(n_tiles, 2)
    TB = _round_up(_cdiv(B, n_tiles), row_mult)
    B_pad = _round_up(B, TB)
    grid = (B_pad // TB,)

    feats = jnp.pad(features.astype(mm_dtype), ((0, B_pad - B), (0, D_pad - D)))

    # VMEM budget: streamed tiles (double-buffered), resident operands
    # (conservatively assume 2 buffers; single-buffering only needs less),
    # plus the in-kernel f32 intermediates (y, old, new, img staging).
    budget = (2 * TB * D_pad * isz                 # feature tiles
              + 2 * TB * C_pad * 4                 # output tiles (f32)
              + 2 * D_pad * (2 * D_pad) * isz      # fused adapter weights
              + 2 * 8 * (2 * D_pad) * 4            # bias (sublane-padded, f32)
              + 2 * D_pad * C_pad * isz            # normalized text
              + 5 * TB * D_pad * 4)                # f32 intermediates in the body
    cap = _vmem_capacity_bytes()
    vmem_limit = int(min(max(budget * 5 // 4 + (2 << 20), 16 << 20),
                         (cap * 85) // 100))       # ~15% headroom under physical VMEM

    kernel = functools.partial(_multiple_adapter_kernel, d_pad=D_pad,
                               ebd_weight=prepared.ebd_weight)

    def _call(single_buffer_constants):
        const_kw = {}
        if single_buffer_constants and hasattr(pl, "Buffered"):
            # Constant index_map -> double-buffering these only wastes VMEM.
            const_kw = dict(pipeline_mode=pl.Buffered(1))
        return pl.pallas_call(
            kernel,
            out_shape=jax.ShapeDtypeStruct((B_pad, C_pad), jnp.float32),
            grid=grid,
            in_specs=[
                pl.BlockSpec((TB, D_pad), lambda i: (i, 0)),                     # streamed
                pl.BlockSpec((D_pad, 2 * D_pad), lambda i: (0, 0), **const_kw),  # resident weights
                pl.BlockSpec((1, 2 * D_pad), lambda i: (0, 0), **const_kw),      # resident bias
                pl.BlockSpec((D_pad, C_pad), lambda i: (0, 0), **const_kw),      # resident text
            ],
            out_specs=pl.BlockSpec((TB, C_pad), lambda i: (i, 0)),
            compiler_params=pltpu.CompilerParams(
                dimension_semantics=("parallel",),
                vmem_limit_bytes=vmem_limit),
        )(feats, prepared.w_cat, prepared.b_cat, prepared.text)

    try:
        out = _call(True)
    except Exception:
        # Fallback: let Pallas default-double-buffer the constant operands.
        out = _call(False)

    return out[:B, :C]


def multiple_adapter_forward(features, w_old, b_old, w_new, b_new,
                             text_features, *, ebd_weight=0.5,
                             temperature=0.01, block_b=256,
                             matmul_dtype=jnp.bfloat16):
    """Convenience one-shot forward (prepare + apply). For repeated inference,
    call prepare_multiple_adapter() once and multiple_adapter_apply() per batch."""
    prepared = prepare_multiple_adapter(
        w_old, b_old, w_new, b_new, text_features,
        ebd_weight=ebd_weight, temperature=temperature,
        matmul_dtype=matmul_dtype)
    return multiple_adapter_apply(prepared, features, block_b=block_b)


def _reference(features, w_old, b_old, w_new, b_new, text_features,
               ebd_weight, temperature):
    old = features @ w_old + b_old
    new = features @ w_new + b_new
    old = old / jnp.linalg.norm(old, axis=-1, keepdims=True)
    new = new / jnp.linalg.norm(new, axis=-1, keepdims=True)
    img = ebd_weight * old + (1.0 - ebd_weight) * new
    t = text_features / jnp.linalg.norm(text_features, axis=0, keepdims=True)
    return img @ t / temperature


if __name__ == "__main__":
    key = jax.random.PRNGKey(0)
    k_feat, k_wo, k_bo, k_wn, k_bn, k_txt = jax.random.split(key, 6)

    B = 8      # batch of image features
    D = 32     # embedding dim
    C = 4      # number of classes (text prompts)
    EBD_WEIGHT = 0.5
    TEMPERATURE = 0.01

    features = jax.random.normal(k_feat, (B, D), dtype=jnp.float32)

    # Synthetic adapter params (Linear D->D with bias), stored [D_in, D_out].
    w_old = jax.random.normal(k_wo, (D, D), dtype=jnp.float32) * 0.05
    b_old = jax.random.normal(k_bo, (1, D), dtype=jnp.float32) * 0.01
    # "init_near_identity": new adapter starts from old adapter, slightly perturbed.
    w_new = w_old + jax.random.normal(k_wn, (D, D), dtype=jnp.float32) * 0.005
    b_new = b_old + jax.random.normal(k_bn, (1, D), dtype=jnp.float32) * 0.001

    # Synthetic text embeddings [D, C] (torch.stack(..., dim=1) layout).
    # TODO(synk): real module loads these from a JSON file on disk (.cuda());
    # here they are passed in as an in-memory array.
    text_features = jax.random.normal(k_txt, (D, C), dtype=jnp.float32)

    ref = _reference(features, w_old, b_old, w_new, b_new, text_features,
                     EBD_WEIGHT, TEMPERATURE)

    # Default (bf16 GEMM operand) path: prepare once, apply per batch.
    prepared_bf16 = prepare_multiple_adapter(
        w_old, b_old, w_new, b_new, text_features,
        ebd_weight=EBD_WEIGHT, temperature=TEMPERATURE,
        matmul_dtype=jnp.bfloat16)
    logits = multiple_adapter_apply(prepared_bf16, features)
    logits = jax.block_until_ready(logits)
    assert logits.shape == (B, C)
    # bf16 operands: looser tolerance (logits are amplified by 1/temperature).
    assert jnp.allclose(logits, ref, rtol=5e-2, atol=5e-1), (
        "Pallas bf16 kernel output mismatch vs reference")

    # Full-f32 path for tight numerical parity with the PyTorch reference.
    prepared_f32 = prepare_multiple_adapter(
        w_old, b_old, w_new, b_new, text_features,
        ebd_weight=EBD_WEIGHT, temperature=TEMPERATURE,
        matmul_dtype=None)
    logits_f32 = jax.block_until_ready(
        multiple_adapter_apply(prepared_f32, features))
    assert jnp.allclose(logits_f32, ref, rtol=2e-4, atol=2e-4), (
        "Pallas f32 kernel output mismatch vs reference")

    print("KERNEL_OK")
</pallas_src>

<mosaic_0001>
module attributes {stable_mosaic.version = 11 : i64} {
  func.func @_multiple_adapter_kernel(%arg0: i32, %arg1: memref<16x128xbf16, #tpu.memory_space<vmem>>, %arg2: memref<128x256xbf16, #tpu.memory_space<vmem>>, %arg3: memref<1x256xf32, #tpu.memory_space<vmem>>, %arg4: memref<128x128xbf16, #tpu.memory_space<vmem>>, %arg5: memref<16x128xf32, #tpu.memory_space<vmem>>) attributes {dimension_semantics = [#tpu.dimension_semantics<parallel>], iteration_bounds = array<i64: 1>, scalar_prefetch = 0 : i64, scratch_operands = 0 : i64, tpu.core_type = #tpu.core_type<tc>, window_params = [{transform_indices = @transform_0, window_bounds = array<i64: 16, 128>}, {pipeline_mode = #tpu.pipeline_mode<synchronous>, transform_indices = @transform_1, window_bounds = array<i64: 128, 256>}, {pipeline_mode = #tpu.pipeline_mode<synchronous>, transform_indices = @transform_2, window_bounds = array<i64: 1, 256>}, {pipeline_mode = #tpu.pipeline_mode<synchronous>, transform_indices = @transform_3, window_bounds = array<i64: 128, 128>}, {transform_indices = @transform_4, window_bounds = array<i64: 16, 128>}]} {
    %c0 = arith.constant 0 : index
    %c0_0 = arith.constant 0 : index
    %0 = vector.load %arg1[%c0, %c0_0] : memref<16x128xbf16, #tpu.memory_space<vmem>>, vector<16x128xbf16>
    %c0_1 = arith.constant 0 : index
    %c0_2 = arith.constant 0 : index
    %1 = vector.load %arg2[%c0_1, %c0_2] : memref<128x256xbf16, #tpu.memory_space<vmem>>, vector<128x256xbf16>
    %cst = arith.constant dense<0.000000e+00> : vector<16x256xf32>
    %2 = tpu.matmul %0, %1, %cst {dimension_numbers = #tpu.dot_dimension_numbers<[1], [0], [0], [1], [0, 0, 1, 1], [], []>} : vector<16x128xbf16>, vector<128x256xbf16>, vector<16x256xf32> -> vector<16x256xf32>
    %c0_3 = arith.constant 0 : index
    %c0_4 = arith.constant 0 : index
    %3 = vector.load %arg3[%c0_3, %c0_4] : memref<1x256xf32, #tpu.memory_space<vmem>>, vector<1x256xf32>
    %4 = vector.broadcast %3 : vector<1x256xf32> to vector<16x256xf32>
    %5 = arith.addf %2, %4 : vector<16x256xf32>
    %6 = vector.extract_strided_slice %5 {offsets = [0, 0], sizes = [16, 128], strides = [1, 1]} : vector<16x256xf32> to vector<16x128xf32>
    %7 = vector.extract_strided_slice %5 {offsets = [0, 128], sizes = [16, 128], strides = [1, 1]} : vector<16x256xf32> to vector<16x128xf32>
    %8 = arith.mulf %6, %6 : vector<16x128xf32>
    %cst_5 = arith.constant dense<0.000000e+00> : vector<16xf32>
    %9 = vector.multi_reduction <add>, %8, %cst_5 [1] : vector<16x128xf32> to vector<16xf32>
    %10 = vector.shape_cast %9 : vector<16xf32> to vector<16x1xf32>
    %cst_6 = arith.constant 9.99999996E-13 : f32
    %11 = vector.broadcast %cst_6 : f32 to vector<16x1xf32>
    %12 = arith.addf %10, %11 : vector<16x1xf32>
    %13 = math.rsqrt %12 : vector<16x1xf32>
    %14 = arith.mulf %7, %7 : vector<16x128xf32>
    %cst_7 = arith.constant dense<0.000000e+00> : vector<16xf32>
    %15 = vector.multi_reduction <add>, %14, %cst_7 [1] : vector<16x128xf32> to vector<16xf32>
    %16 = vector.shape_cast %15 : vector<16xf32> to vector<16x1xf32>
    %cst_8 = arith.constant 9.99999996E-13 : f32
    %17 = vector.broadcast %cst_8 : f32 to vector<16x1xf32>
    %18 = arith.addf %16, %17 : vector<16x1xf32>
    %19 = math.rsqrt %18 : vector<16x1xf32>
    %cst_9 = arith.constant 5.000000e-01 : f32
    %20 = vector.broadcast %cst_9 : f32 to vector<16x1xf32>
    %21 = arith.mulf %20, %13 : vector<16x1xf32>
    %22 = vector.broadcast %21 : vector<16x1xf32> to vector<16x128xf32>
    %23 = arith.mulf %22, %6 : vector<16x128xf32>
    %cst_10 = arith.constant 5.000000e-01 : f32
    %24 = vector.broadcast %cst_10 : f32 to vector<16x1xf32>
    %25 = arith.mulf %24, %19 : vector<16x1xf32>
    %26 = vector.broadcast %25 : vector<16x1xf32> to vector<16x128xf32>
    %27 = arith.mulf %26, %7 : vector<16x128xf32>
    %28 = arith.addf %23, %27 : vector<16x128xf32>
    %c0_11 = arith.constant 0 : index
    %c0_12 = arith.constant 0 : index
    %29 = vector.load %arg4[%c0_11, %c0_12] : memref<128x128xbf16, #tpu.memory_space<vmem>>, vector<128x128xbf16>
    %30 = arith.truncf %28 : vector<16x128xf32> to vector<16x128xbf16>
    %cst_13 = arith.constant dense<0.000000e+00> : vector<16x128xf32>
    %31 = tpu.matmul %30, %29, %cst_13 {dimension_numbers = #tpu.dot_dimension_numbers<[1], [0], [0], [1], [0, 0, 1, 1], [], []>} : vector<16x128xbf16>, vector<128x128xbf16>, vector<16x128xf32> -> vector<16x128xf32>
    %c0_14 = arith.constant 0 : index
    %c0_15 = arith.constant 0 : index
    %32 = vector.load %arg5[%c0_14, %c0_15] : memref<16x128xf32, #tpu.memory_space<vmem>>, vector<16x128xf32>
    tpu.vector_store %arg5[%c0_14, %c0_15], %31 {strides = array<i32>} : memref<16x128xf32, #tpu.memory_space<vmem>>, vector<16x128xf32>,
    return
  }
  func.func @transform_0(%arg0: i32) -> (i32, i32) {
    %c0_i32 = arith.constant 0 : i32
    %c0_i32_0 = arith.constant 0 : i32
    return %arg0, %c0_i32 : i32, i32
  }
  func.func @transform_1(%arg0: i32) -> (i32, i32) {
    %c0_i32 = arith.constant 0 : i32
    %c0_i32_0 = arith.constant 0 : i32
    %c0_i32_1 = arith.constant 0 : i32
    return %c0_i32, %c0_i32_0 : i32, i32
  }
  func.func @transform_2(%arg0: i32) -> (i32, i32) {
    %c0_i32 = arith.constant 0 : i32
    %c0_i32_0 = arith.constant 0 : i32
    %c0_i32_1 = arith.constant 0 : i32
    return %c0_i32, %c0_i32_0 : i32, i32
  }
  func.func @transform_3(%arg0: i32) -> (i32, i32) {
    %c0_i32 = arith.constant 0 : i32
    %c0_i32_0 = arith.constant 0 : i32
    %c0_i32_1 = arith.constant 0 : i32
    return %c0_i32, %c0_i32_0 : i32, i32
  }
  func.func @transform_4(%arg0: i32) -> (i32, i32) {
    %c0_i32 = arith.constant 0 : i32
    %c0_i32_0 = arith.constant 0 : i32
    return %arg0, %c0_i32 : i32, i32
  }
}

module attributes {stable_mosaic.version = 11 : i64} {
  func.func @_multiple_adapter_kernel(%arg0: i32, %arg1: memref<16x128xbf16, #tpu.memory_space<vmem>>, %arg2: memref<128x256xbf16, #tpu.memory_space<vmem>>, %arg3: memref<1x256xf32, #tpu.memory_space<vmem>>, %arg4: memref<128x128xbf16, #tpu.memory_space<vmem>>, %arg5: memref<16x128xf32, #tpu.memory_space<vmem>>) attributes {dimension_semantics = [#tpu.dimension_semantics<parallel>], iteration_bounds = array<i64: 1>, scalar_prefetch = 0 : i64, scratch_operands = 0 : i64, tpu.core_type = #tpu.core_type<tc>, window_params = [{transform_indices = @transform_0, window_bounds = array<i64: 16, 128>}, {pipeline_mode = #tpu.pipeline_mode<synchronous>, transform_indices = @transform_1, window_bounds = array<i64: 128, 256>}, {pipeline_mode = #tpu.pipeline_mode<synchronous>, transform_indices = @transform_2, window_bounds = array<i64: 1, 256>}, {pipeline_mode = #tpu.pipeline_mode<synchronous>, transform_indices = @transform_3, window_bounds = array<i64: 128, 128>}, {transform_indices = @transform_4, window_bounds = array<i64: 16, 128>}]} {
    %c0 = arith.constant 0 : index
    %c0_0 = arith.constant 0 : index
    %0 = vector.load %arg1[%c0, %c0_0] : memref<16x128xbf16, #tpu.memory_space<vmem>>, vector<16x128xbf16>
    %c0_1 = arith.constant 0 : index
    %c0_2 = arith.constant 0 : index
    %1 = vector.load %arg2[%c0_1, %c0_2] : memref<128x256xbf16, #tpu.memory_space<vmem>>, vector<128x256xbf16>
    %cst = arith.constant dense<0.000000e+00> : vector<16x256xf32>
    %2 = tpu.matmul %0, %1, %cst {dimension_numbers = #tpu.dot_dimension_numbers<[1], [0], [0], [1], [0, 0, 1, 1], [], []>} : vector<16x128xbf16>, vector<128x256xbf16>, vector<16x256xf32> -> vector<16x256xf32>
    %c0_3 = arith.constant 0 : index
    %c0_4 = arith.constant 0 : index
    %3 = vector.load %arg3[%c0_3, %c0_4] : memref<1x256xf32, #tpu.memory_space<vmem>>, vector<1x256xf32>
    %4 = vector.broadcast %3 : vector<1x256xf32> to vector<16x256xf32>
    %5 = arith.addf %2, %4 : vector<16x256xf32>
    %6 = vector.extract_strided_slice %5 {offsets = [0, 0], sizes = [16, 128], strides = [1, 1]} : vector<16x256xf32> to vector<16x128xf32>
    %7 = vector.extract_strided_slice %5 {offsets = [0, 128], sizes = [16, 128], strides = [1, 1]} : vector<16x256xf32> to vector<16x128xf32>
    %8 = arith.mulf %6, %6 : vector<16x128xf32>
    %cst_5 = arith.constant dense<0.000000e+00> : vector<16xf32>
    %9 = vector.multi_reduction <add>, %8, %cst_5 [1] : vector<16x128xf32> to vector<16xf32>
    %10 = vector.shape_cast %9 : vector<16xf32> to vector<16x1xf32>
    %cst_6 = arith.constant 9.99999996E-13 : f32
    %11 = vector.broadcast %cst_6 : f32 to vector<16x1xf32>
    %12 = arith.addf %10, %11 : vector<16x1xf32>
    %13 = math.rsqrt %12 : vector<16x1xf32>
    %14 = arith.mulf %7, %7 : vector<16x128xf32>
    %cst_7 = arith.constant dense<0.000000e+00> : vector<16xf32>
    %15 = vector.multi_reduction <add>, %14, %cst_7 [1] : vector<16x128xf32> to vector<16xf32>
    %16 = vector.shape_cast %15 : vector<16xf32> to vector<16x1xf32>
    %cst_8 = arith.constant 9.99999996E-13 : f32
    %17 = vector.broadcast %cst_8 : f32 to vector<16x1xf32>
    %18 = arith.addf %16, %17 : vector<16x1xf32>
    %19 = math.rsqrt %18 : vector<16x1xf32>
    %cst_9 = arith.constant 5.000000e-01 : f32
    %20 = vector.broadcast %cst_9 : f32 to vector<16x1xf32>
    %21 = arith.mulf %20, %13 : vector<16x1xf32>
    %22 = vector.broadcast %21 : vector<16x1xf32> to vector<16x128xf32>
    %23 = arith.mulf %22, %6 : vector<16x128xf32>
    %cst_10 = arith.constant 5.000000e-01 : f32
    %24 = vector.broadcast %cst_10 : f32 to vector<16x1xf32>
    %25 = arith.mulf %24, %19 : vector<16x1xf32>
    %26 = vector.broadcast %25 : vector<16x1xf32> to vector<16x128xf32>
    %27 = arith.mulf %26, %7 : vector<16x128xf32>
    %28 = arith.addf %23, %27 : vector<16x128xf32>
    %c0_11 = arith.constant 0 : index
    %c0_12 = arith.constant 0 : index
    %29 = vector.load %arg4[%c0_11, %c0_12] : memref<128x128xbf16, #tpu.memory_space<vmem>>, vector<128x128xbf16>
    %30 = arith.truncf %28 : vector<16x128xf32> to vector<16x128xbf16>
    %cst_13 = arith.constant dense<0.000000e+00> : vector<16x128xf32>
    %31 = tpu.matmul %30, %29, %cst_13 {dimension_numbers = #tpu.dot_dimension_numbers<[1], [0], [0], [1], [0, 0, 1, 1], [], []>} : vector<16x128xbf16>, vector<128x128xbf16>, vector<16x128xf32> -> vector<16x128xf32>
    %c0_14 = arith.constant 0 : index
    %c0_15 = arith.constant 0 : index
    %32 = vector.load %arg5[%c0_14, %c0_15] : memref<16x128xf32, #tpu.memory_space<vmem>>, vector<16x128xf32>
    tpu.vector_store %arg5[%c0_14, %c0_15], %31 {strides = array<i32>} : memref<16x128xf32, #tpu.memory_space<vmem>>, vector<16x128xf32>,
    return
  }
  func.func @transform_0(%arg0: i32) -> (i32, i32) {
    %c0_i32 = arith.constant 0 : i32
    %c0_i32_0 = arith.constant 0 : i32
    return %arg0, %c0_i32 : i32, i32
  }
  func.func @transform_1(%arg0: i32) -> (i32, i32) {
    %c0_i32 = arith.constant 0 : i32
    %c0_i32_0 = arith.constant 0 : i32
    %c0_i32_1 = arith.constant 0 : i32
    return %c0_i32, %c0_i32_0 : i32, i32
  }
  func.func @transform_2(%arg0: i32) -> (i32, i32) {
    %c0_i32 = arith.constant 0 : i32
    %c0_i32_0 = arith.constant 0 : i32
    %c0_i32_1 = arith.constant 0 : i32
    return %c0_i32, %c0_i32_0 : i32, i32
  }
  func.func @transform_3(%arg0: i32) -> (i32, i32) {
    %c0_i32 = arith.constant 0 : i32
    %c0_i32_0 = arith.constant 0 : i32
    %c0_i32_1 = arith.constant 0 : i32
    return %c0_i32, %c0_i32_0 : i32, i32
  }
  func.func @transform_4(%arg0: i32) -> (i32, i32) {
    %c0_i32 = arith.constant 0 : i32
    %c0_i32_0 = arith.constant 0 : i32
    return %arg0, %c0_i32 : i32, i32
  }
}

</mosaic_0001>

<llo_original>
// kernel: tpu_custom_call.1
$region0: #{tpu_custom_call.1}
  #allocation0 [shape = 'u32[]', space=smem, size = 0x4, offset = 0x4, fixed_abs, tag = 'smem constant byte address 0x4 - core index']
  #allocation1 [shape = 'u32[144,128]{1,0:T(1,128)}', space=vmem, size = 0x12000, scoped, tag = 'internal scratch']
  %s0 = inlined_call_operand.hbm [shape: bf16[16,128], index: 0, kind: input, shape index: {}]
  %s1 = inlined_call_operand.hbm [shape: bf16[128,256], index: 1, kind: input, shape index: {}]
  %s2 = inlined_call_operand.vmem [shape: f32[1,256], index: 2, kind: input, shape index: {}]
  %s3 = inlined_call_operand.hbm [shape: bf16[128,128], index: 3, kind: input, shape index: {}]
  %s4 = inlined_call_operand.hbm [shape: f32[16,128], index: 4, kind: output, shape index: {}]
  %s5 = sld [smem:[#allocation0]]
  $region38: #{tpu_custom_call.1} parent=0
    _
  %s7 = ssub.s32 1, %s5
  %s8 = scalar_select 0, %s7, %s5
  $region1: #{tpu_custom_call.1} parent=0
    #allocation2 [shape = 'u8[4096]{0}', space=vmem, size = 0x1000, scoped, tag = 'input window, operand 0, single buffered']
    #allocation3 [shape = 's32[1]{0}', space=sflag, size = 0x4, scoped, tag = 'scoped memory for tpu_custom_call.1']
    #allocation4 [shape = 's32[1]{0}', space=sflag, size = 0x4, scoped, tag = 'scoped memory for tpu_custom_call.1']
    #allocation5 [shape = 'u8[65536]{0}', space=vmem, size = 0x10000, scoped, tag = 'input window, operand 1, single buffered']
    #allocation6 [shape = 's32[1]{0}', space=sflag, size = 0x4, scoped, tag = 'scoped memory for tpu_custom_call.1']
    #allocation7 [shape = 'u8[32768]{0}', space=vmem, size = 0x8000, scoped, tag = 'input window, operand 3, single buffered']
    #allocation8 [shape = 'u8[8192]{0}', space=vmem, size = 0x2000, scoped, tag = 'output window, operand 0, single buffered']
    %9 = vsyncpa [#allocation3], 0
    %10 = vsyncpa [#allocation6], 0
    %11 = vsyncpa [#allocation4], 0
    // Predicated region
    $region2: #{tpu_custom_call.1} parent=1 // pred_check
      _
    $region3: #{tpu_custom_call.1} parent=1 // pred_check_branch
      %13 = sbr.rel (0) target = $region5
    $region4: #{tpu_custom_call.1} parent=1 // pred_region
      %s15 = ssub.s32 128, 128
      %16 = vsyncadd [#allocation3], %s15
      %s17 = sshll.u32 [#allocation2], 4
      %s18 = int_to_ptr.vmem [resolvable:$true] %s17
      %23 = dma.hbm_to_vmem [thread:$0]  %s0, 128, %s18, [#allocation3], 64, 64, 4
    $region5: #{tpu_custom_call.1} parent=1 // pred_fallthru
      _
    // Predicated region
    $region6: #{tpu_custom_call.1} parent=1 // pred_check
      _
    $region7: #{tpu_custom_call.1} parent=1 // pred_check_branch
      %25 = sbr.rel (0) target = $region9
    $region8: #{tpu_custom_call.1} parent=1 // pred_region
      %s27 = ssub.s32 2048, 2048
      %28 = vsyncadd [#allocation6], %s27
      %s29 = sshll.u32 [#allocation5], 4
      %s30 = int_to_ptr.vmem [resolvable:$true] %s29
      %35 = dma.hbm_to_vmem [thread:$0]  %s1, 2048, %s30, [#allocation6], 128, 128, 8
    $region9: #{tpu_custom_call.1} parent=1 // pred_fallthru
      _
    // Predicated region
    $region10: #{tpu_custom_call.1} parent=1 // pred_check
      _
    $region11: #{tpu_custom_call.1} parent=1 // pred_check_branch
      %37 = sbr.rel (0) target = $region13
    $region12: #{tpu_custom_call.1} parent=1 // pred_region
      _
    $region13: #{tpu_custom_call.1} parent=1 // pred_fallthru
      _
    // Predicated region
    $region14: #{tpu_custom_call.1} parent=1 // pred_check
      _
    $region15: #{tpu_custom_call.1} parent=1 // pred_check_branch
      %39 = sbr.rel (0) target = $region17
    $region16: #{tpu_custom_call.1} parent=1 // pred_region
      %s41 = ssub.s32 1024, 1024
      %42 = vsyncadd [#allocation6], %s41
      %s43 = sshll.u32 [#allocation7], 4
      %s44 = int_to_ptr.vmem [resolvable:$true] %s43
      %49 = dma.hbm_to_vmem [thread:$0]  %s3, 1024, %s44, [#allocation6], 64, 64, 4
    $region17: #{tpu_custom_call.1} parent=1 // pred_fallthru
      _
    // Predicated region
    $region18: #{tpu_custom_call.1} parent=1 // pred_check
      _
    $region19: #{tpu_custom_call.1} parent=1 // pred_check_branch
      %51 = sbr.rel (0) target = $region21
    $region20: #{tpu_custom_call.1} parent=1 // pred_region
      %52 = dma.done [#allocation3], 128
    $region21: #{tpu_custom_call.1} parent=1 // pred_fallthru
      _
    // Predicated region
    $region22: #{tpu_custom_call.1} parent=1 // pred_check
      _
    $region23: #{tpu_custom_call.1} parent=1 // pred_check_branch
      %54 = sbr.rel (0) target = $region25
    $region24: #{tpu_custom_call.1} parent=1 // pred_region
      %55 = dma.done [#allocation6], 2048
    $region25: #{tpu_custom_call.1} parent=1 // pred_fallthru
      _
    // Predicated region
    $region26: #{tpu_custom_call.1} parent=1 // pred_check
      _
    $region27: #{tpu_custom_call.1} parent=1 // pred_check_branch
      %57 = sbr.rel (0) target = $region29
    $region28: #{tpu_custom_call.1} parent=1 // pred_region
      %58 = dma.done [#allocation6], 1024
    $region29: #{tpu_custom_call.1} parent=1 // pred_fallthru
      _
    %v60 = vld [vmem:[#allocation2] sm:$0xf]
    %v61 = vld [vmem:[#allocation2 + $0x4] sm:$0xf]
    %v62 = vld [vmem:[#allocation5] sm:$0xff]
    %v63 = vld [vmem:[#allocation5 + $0x8] sm:$0xff]
    %v64 = vld [vmem:[#allocation5 + $0x10] sm:$0xff]
    %v65 = vld [vmem:[#allocation5 + $0x18] sm:$0xff]
    %v66 = vld [vmem:[#allocation5 + $0x20] sm:$0xff]
    %v67 = vld [vmem:[#allocation5 + $0x28] sm:$0xff]
    %v68 = vld [vmem:[#allocation5 + $0x30] sm:$0xff]
    %v69 = vld [vmem:[#allocation5 + $0x38] sm:$0xff]
    %v70 = vld [vmem:[#allocation5 + $0x40] sm:$0xff]
    %v71 = vld [vmem:[#allocation5 + $0x48] sm:$0xff]
    %v72 = vld [vmem:[#allocation5 + $0x50] sm:$0xff]
    %v73 = vld [vmem:[#allocation5 + $0x58] sm:$0xff]
    %v74 = vld [vmem:[#allocation5 + $0x60] sm:$0xff]
    %v75 = vld [vmem:[#allocation5 + $0x68] sm:$0xff]
    %v76 = vld [vmem:[#allocation5 + $0x70] sm:$0xff]
    %v77 = vld [vmem:[#allocation5 + $0x78] sm:$0xff]
    %v78 = vld [vmem:[%s2] sm:$0x3]
    %v80 = vlaneseq
    %v81 = vshrl.u32 %v80, 7
    %v82 = vsub.s32 0, %v81
    %v83 = vrot.slane %v78, %v82
    %v84 = vlaneseq
    %v85 = vshrl.u32 %v84, 7
    %v86 = vsub.s32 1, %v85
    %v87 = vrot.slane %v78, %v86
    %v92 = vunpack.c.l.b16 %v60
    %v93 = vunpack.c.l.b16 %v61
    %v94 = vpack.c.b16 %v93, %v92
    %v112 = vunpack.c.l.b16 %v62
    %v113 = vunpack.c.h.b16 %v62
    %v114 = vunpack.c.l.b16 %v63
    %v115 = vunpack.c.h.b16 %v63
    %v116 = vunpack.c.l.b16 %v64
    %v117 = vunpack.c.h.b16 %v64
    %v118 = vunpack.c.l.b16 %v65
    %v119 = vunpack.c.h.b16 %v65
    %v120 = vunpack.c.l.b16 %v66
    %v121 = vunpack.c.h.b16 %v66
    %v122 = vunpack.c.l.b16 %v67
    %v123 = vunpack.c.h.b16 %v67
    %v124 = vunpack.c.l.b16 %v68
    %v125 = vunpack.c.h.b16 %v68
    %v126 = vunpack.c.l.b16 %v69
    %v127 = vunpack.c.h.b16 %v69
    %v128 = vunpack.c.l.b16 %v70
    %v129 = vunpack.c.h.b16 %v70
    %v130 = vunpack.c.l.b16 %v71
    %v131 = vunpack.c.h.b16 %v71
    %v132 = vunpack.c.l.b16 %v72
    %v133 = vunpack.c.h.b16 %v72
    %v134 = vunpack.c.l.b16 %v73
    %v135 = vunpack.c.h.b16 %v73
    %v136 = vunpack.c.l.b16 %v74
    %v137 = vunpack.c.h.b16 %v74
    %v138 = vunpack.c.l.b16 %v75
    %v139 = vunpack.c.h.b16 %v75
    %v140 = vunpack.c.l.b16 %v76
    %v141 = vunpack.c.h.b16 %v76
    %v142 = vunpack.c.l.b16 %v77
    %v143 = vunpack.c.h.b16 %v77
    %v144 = vpack.c.b16 %v114, %v112
    %v145 = vpack.c.b16 %v115, %v113
    %v146 = vpack.c.b16 %v118, %v116
    %v147 = vpack.c.b16 %v119, %v117
    %v148 = vpack.c.b16 %v122, %v120
    %v149 = vpack.c.b16 %v123, %v121
    %v150 = vpack.c.b16 %v126, %v124
    %v151 = vpack.c.b16 %v127, %v125
    %v152 = vpack.c.b16 %v130, %v128
    %v153 = vpack.c.b16 %v131, %v129
    %v154 = vpack.c.b16 %v134, %v132
    %v155 = vpack.c.b16 %v135, %v133
    %v156 = vpack.c.b16 %v138, %v136
    %v157 = vpack.c.b16 %v139, %v137
    %v158 = vpack.c.b16 %v142, %v140
    %v159 = vpack.c.b16 %v143, %v141
    %176 = vmatprep.subr.bf16.mxu0 %v145
    %177 = vmatpush1.bf16.msra.mxu0 %v144
    %178 = vmatprep.subr.bf16.mxu0 %v147
    %179 = vmatpush1.bf16.msra.mxu0 %v146
    %180 = vmatprep.subr.bf16.mxu0 %v149
    %181 = vmatpush1.bf16.msra.mxu0 %v148
    %182 = vmatprep.subr.bf16.mxu0 %v151
    %183 = vmatpush1.bf16.msra.mxu0 %v150
    %184 = vmatprep.subr.bf16.mxu0 %v153
    %185 = vmatpush1.bf16.msra.mxu0 %v152
    %186 = vmatprep.subr.bf16.mxu0 %v155
    %187 = vmatpush1.bf16.msra.mxu0 %v154
    %188 = vmatprep.subr.bf16.mxu0 %v157
    %189 = vmatpush1.bf16.msra.mxu0 %v156
    %190 = vmatprep.subr.bf16.mxu0 %v159
    %191 = vmatpush1.bf16.msra.mxu0 %v158
    %192 = vmatprep.subr.bf16.mxu0 0
    %193 = vmatpush1.bf16.msra.mxu0 0
    %194 = vmatprep.subr.bf16.mxu0 0
    %195 = vmatpush1.bf16.msra.mxu0 0
    %196 = vmatprep.subr.bf16.mxu0 0
    %197 = vmatpush1.bf16.msra.mxu0 0
    %198 = vmatprep.subr.bf16.mxu0 0
    %199 = vmatpush1.bf16.msra.mxu0 0
    %200 = vmatprep.subr.bf16.mxu0 0
    %201 = vmatpush1.bf16.msra.mxu0 0
    %202 = vmatprep.subr.bf16.mxu0 0
    %203 = vmatpush1.bf16.msra.mxu0 0
    %204 = vmatprep.subr.bf16.mxu0 0
    %205 = vmatpush1.bf16.msra.mxu0 0
    %206 = vmatprep.subr.bf16.mxu0 0
    %207 = vmatpush1.bf16.msra.mxu0 0
    %208 = vmatprep.mubr.bf16.mxu0 0
    %209 = vmatmul.mubr.bf16.gmra.mrb[0].mxu0 %v94
    %v210 = vpop.f32.mrb[0].mxu0
    %v211 = vadd.f32 %v83, %v210
    %v212 = vpop.f32.mrb[0].mxu0
    %v213 = vadd.f32 %v87, %v212
    %v214 = vpop.f32.mrb[0].mxu0
    %v215 = vadd.f32 %v83, %v214
    %v216 = vpop.f32.mrb[0].mxu0
    %v217 = vadd.f32 %v87, %v216
    %218 = vdwg.mxu0
    %v219 = vmul.f32 %v211, %v211
    %v220 = vmul.f32 %v215, %v215
    %221 = vadd.xlane.f32.xlu0 %v219
    %v222 = vpop.xlane.xlu0 %221
    %223 = vadd.xlane.f32.xlu0 %v220
    %v224 = vpop.xlane.xlu0 %223
    %v225 = vadd.f32 %v222, 1e-12
    %v226 = vadd.f32 %v224, 1e-12
    %v227 = vrsqrt.pop %v225
    %v228 = vrsqrt.pop %v226
    %v229 = vmul.f32 %v213, %v213
    %v230 = vmul.f32 %v217, %v217
    %231 = vadd.xlane.f32.xlu0 %v229
    %v232 = vpop.xlane.xlu0 %231
    %233 = vadd.xlane.f32.xlu0 %v230
    %v234 = vpop.xlane.xlu0 %233
    %v235 = vadd.f32 %v232, 1e-12
    %v236 = vadd.f32 %v234, 1e-12
    %v237 = vrsqrt.pop %v235
    %v238 = vrsqrt.pop %v236
    %v239 = vmul.f32 %v227, 0.5
    %v240 = vmul.f32 %v228, 0.5
    %v241 = vmul.f32 %v239, %v211
    %v242 = vmul.f32 %v240, %v215
    %v243 = vmul.f32 %v237, 0.5
    %v244 = vmul.f32 %v238, 0.5
    %v245 = vmul.f32 %v243, %v213
    %v246 = vmul.f32 %v244, %v217
    %v247 = vadd.f32 %v241, %v245
    %v248 = vadd.f32 %v242, %v246
    %v249 = vld [vmem:[#allocation7] sm:$0xf]
    %v250 = vld [vmem:[#allocation7 + $0x4] sm:$0xf]
    %v251 = vld [vmem:[#allocation7 + $0x8] sm:$0xf]
    %v252 = vld [vmem:[#allocation7 + $0xc] sm:$0xf]
    %v253 = vld [vmem:[#allocation7 + $0x10] sm:$0xf]
    %v254 = vld [vmem:[#allocation7 + $0x14] sm:$0xf]
    %v255 = vld [vmem:[#allocation7 + $0x18] sm:$0xf]
    %v256 = vld [vmem:[#allocation7 + $0x1c] sm:$0xf]
    %v257 = vld [vmem:[#allocation7 + $0x20] sm:$0xf]
    %v258 = vld [vmem:[#allocation7 + $0x24] sm:$0xf]
    %v259 = vld [vmem:[#allocation7 + $0x28] sm:$0xf]
    %v260 = vld [vmem:[#allocation7 + $0x2c] sm:$0xf]
    %v261 = vld [vmem:[#allocation7 + $0x30] sm:$0xf]
    %v262 = vld [vmem:[#allocation7 + $0x34] sm:$0xf]
    %v263 = vld [vmem:[#allocation7 + $0x38] sm:$0xf]
    %v264 = vld [vmem:[#allocation7 + $0x3c] sm:$0xf]
    %v265 = vpack.c.bf16 %v248, %v247
    %v282 = vunpack.c.l.b16 %v249
    %v283 = vunpack.c.l.b16 %v250
    %v284 = vunpack.c.l.b16 %v251
    %v285 = vunpack.c.l.b16 %v252
    %v286 = vunpack.c.l.b16 %v253
    %v287 = vunpack.c.l.b16 %v254
    %v288 = vunpack.c.l.b16 %v255
    %v289 = vunpack.c.l.b16 %v256
    %v290 = vunpack.c.l.b16 %v257
    %v291 = vunpack.c.l.b16 %v258
    %v292 = vunpack.c.l.b16 %v259
    %v293 = vunpack.c.l.b16 %v260
    %v294 = vunpack.c.l.b16 %v261
    %v295 = vunpack.c.l.b16 %v262
    %v296 = vunpack.c.l.b16 %v263
    %v297 = vunpack.c.l.b16 %v264
    %v298 = vpack.c.b16 %v283, %v282
    %v299 = vpack.c.b16 %v285, %v284
    %v300 = vpack.c.b16 %v287, %v286
    %v301 = vpack.c.b16 %v289, %v288
    %v302 = vpack.c.b16 %v291, %v290
    %v303 = vpack.c.b16 %v293, %v292
    %v304 = vpack.c.b16 %v295, %v294
    %v305 = vpack.c.b16 %v297, %v296
    %314 = vmatprep.subr.bf16.mxu0 0
    %315 = vmatpush1.bf16.msra.mxu0 %v298
    %316 = vmatprep.subr.bf16.mxu0 0
    %317 = vmatpush1.bf16.msra.mxu0 %v299
    %318 = vmatprep.subr.bf16.mxu0 0
    %319 = vmatpush1.bf16.msra.mxu0 %v300
    %320 = vmatprep.subr.bf16.mxu0 0
    %321 = vmatpush1.bf16.msra.mxu0 %v301
    %322 = vmatprep.subr.bf16.mxu0 0
    %323 = vmatpush1.bf16.msra.mxu0 %v302
    %324 = vmatprep.subr.bf16.mxu0 0
    %325 = vmatpush1.bf16.msra.mxu0 %v303
    %326 = vmatprep.subr.bf16.mxu0 0
    %327 = vmatpush1.bf16.msra.mxu0 %v304
    %328 = vmatprep.subr.bf16.mxu0 0
    %329 = vmatpush1.bf16.msra.mxu0 %v305
    %330 = vmatprep.subr.bf16.mxu0 0
    %331 = vmatpush1.bf16.msra.mxu0 0
    %332 = vmatprep.subr.bf16.mxu0 0
    %333 = vmatpush1.bf16.msra.mxu0 0
    %334 = vmatprep.subr.bf16.mxu0 0
    %335 = vmatpush1.bf16.msra.mxu0 0
    %336 = vmatprep.subr.bf16.mxu0 0
    %337 = vmatpush1.bf16.msra.mxu0 0
    %338 = vmatprep.subr.bf16.mxu0 0
    %339 = vmatpush1.bf16.msra.mxu0 0
    %340 = vmatprep.subr.bf16.mxu0 0
    %341 = vmatpush1.bf16.msra.mxu0 0
    %342 = vmatprep.subr.bf16.mxu0 0
    %343 = vmatpush1.bf16.msra.mxu0 0
    %344 = vmatprep.subr.bf16.mxu0 0
    %345 = vmatpush1.bf16.msra.mxu0 0
    %346 = vmatprep.mubr.bf16.mxu0 0
    %347 = vmatmul.mubr.bf16.gmra.mrb[0].mxu0 %v265
    %v348 = vpop.f32.mrb[0].mxu0
    %v349 = vadd.f32 0.0, %v348
    %v350 = vpop.f32.mrb[0].mxu0
    %v351 = vpop.f32.mrb[0].mxu0
    %v352 = vadd.f32 0.0, %v351
    %v353 = vpop.f32.mrb[0].mxu0
    %354 = vdwg.mxu0
    %355 = vst [vmem:[#allocation8] sm:$0xff] %v349
    %356 = vst [vmem:[#allocation8 + $0x8] sm:$0xff] %v352
    // Predicated region
    $region30: #{tpu_custom_call.1} parent=1 // pred_check
      _
    $region31: #{tpu_custom_call.1} parent=1 // pred_check_branch
      %358 = sbr.rel (0) target = $region33
    $region32: #{tpu_custom_call.1} parent=1 // pred_region
      %s360 = ssub.s32 256, 256
      %361 = vsyncadd [#allocation4], %s360
      %s362 = sshll.u32 [#allocation8], 4
      %s363 = int_to_ptr.vmem [resolvable:$true] %s362
      %368 = dma.vmem_to_hbm [thread:$0]  %s363, 256, %s4, [#allocation4], 128, 128, 8
    $region33: #{tpu_custom_call.1} parent=1 // pred_fallthru
      _
    // Predicated region
    $region34: #{tpu_custom_call.1} parent=1 // pred_check
      _
    $region35: #{tpu_custom_call.1} parent=1 // pred_check_branch
      %370 = sbr.rel (0) target = $region37
    $region36: #{tpu_custom_call.1} parent=1 // pred_region
      %371 = dma.done [#allocation4], 256
    $region37: #{tpu_custom_call.1} parent=1 // pred_fallthru
      _
    %372 = vsyncpa [#allocation3], 1
    %373 = vsyncpa [#allocation6], 1
    %374 = vsyncpa [#allocation4], 1

// kernel: tpu_custom_call.1
$region0: #{tpu_custom_call.1}
  #allocation0 [shape = 'u32[]', space=smem, size = 0x4, offset = 0x4, fixed_abs, tag = 'smem constant byte address 0x4 - core index']
  #allocation1 [shape = 'u32[144,128]{1,0:T(1,128)}', space=vmem, size = 0x12000, scoped, tag = 'internal scratch']
  %s0 = inlined_call_operand.hbm [shape: bf16[16,128], index: 0, kind: input, shape index: {}]
  %s1 = inlined_call_operand.hbm [shape: bf16[128,256], index: 1, kind: input, shape index: {}]
  %s2 = inlined_call_operand.vmem [shape: f32[1,256], index: 2, kind: input, shape index: {}]
  %s3 = inlined_call_operand.hbm [shape: bf16[128,128], index: 3, kind: input, shape index: {}]
  %s4 = inlined_call_operand.hbm [shape: f32[16,128], index: 4, kind: output, shape index: {}]
  %s5 = sld [smem:[#allocation0]]
  $region38: #{tpu_custom_call.1} parent=0
    _
  %s7 = ssub.s32 1, %s5
  %s8 = scalar_select 0, %s7, %s5
  $region1: #{tpu_custom_call.1} parent=0
    #allocation2 [shape = 'u8[4096]{0}', space=vmem, size = 0x1000, scoped, tag = 'input window, operand 0, single buffered']
    #allocation3 [shape = 's32[1]{0}', space=sflag, size = 0x4, scoped, tag = 'scoped memory for tpu_custom_call.1']
    #allocation4 [shape = 's32[1]{0}', space=sflag, size = 0x4, scoped, tag = 'scoped memory for tpu_custom_call.1']
    #allocation5 [shape = 'u8[65536]{0}', space=vmem, size = 0x10000, scoped, tag = 'input window, operand 1, single buffered']
    #allocation6 [shape = 's32[1]{0}', space=sflag, size = 0x4, scoped, tag = 'scoped memory for tpu_custom_call.1']
    #allocation7 [shape = 'u8[32768]{0}', space=vmem, size = 0x8000, scoped, tag = 'input window, operand 3, single buffered']
    #allocation8 [shape = 'u8[8192]{0}', space=vmem, size = 0x2000, scoped, tag = 'output window, operand 0, single buffered']
    %9 = vsyncpa [#allocation3], 0
    %10 = vsyncpa [#allocation6], 0
    %11 = vsyncpa [#allocation4], 0
    // Predicated region
    $region2: #{tpu_custom_call.1} parent=1 // pred_check
      _
    $region3: #{tpu_custom_call.1} parent=1 // pred_check_branch
      %13 = sbr.rel (0) target = $region5
    $region4: #{tpu_custom_call.1} parent=1 // pred_region
      %s15 = ssub.s32 128, 128
      %16 = vsyncadd [#allocation3], %s15
      %s17 = sshll.u32 [#allocation2], 4
      %s18 = int_to_ptr.vmem [resolvable:$true] %s17
      %23 = dma.hbm_to_vmem [thread:$0]  %s0, 128, %s18, [#allocation3], 64, 64, 4
    $region5: #{tpu_custom_call.1} parent=1 // pred_fallthru
      _
    // Predicated region
    $region6: #{tpu_custom_call.1} parent=1 // pred_check
      _
    $region7: #{tpu_custom_call.1} parent=1 // pred_check_branch
      %25 = sbr.rel (0) target = $region9
    $region8: #{tpu_custom_call.1} parent=1 // pred_region
      %s27 = ssub.s32 2048, 2048
      %28 = vsyncadd [#allocation6], %s27
      %s29 = sshll.u32 [#allocation5], 4
      %s30 = int_to_ptr.vmem [resolvable:$true] %s29
      %35 = dma.hbm_to_vmem [thread:$0]  %s1, 2048, %s30, [#allocation6], 128, 128, 8
    $region9: #{tpu_custom_call.1} parent=1 // pred_fallthru
      _
    // Predicated region
    $region10: #{tpu_custom_call.1} parent=1 // pred_check
      _
    $region11: #{tpu_custom_call.1} parent=1 // pred_check_branch
      %37 = sbr.rel (0) target = $region13
    $region12: #{tpu_custom_call.1} parent=1 // pred_region
      _
    $region13: #{tpu_custom_call.1} parent=1 // pred_fallthru
      _
    // Predicated region
    $region14: #{tpu_custom_call.1} parent=1 // pred_check
      _
    $region15: #{tpu_custom_call.1} parent=1 // pred_check_branch
      %39 = sbr.rel (0) target = $region17
    $region16: #{tpu_custom_call.1} parent=1 // pred_region
      %s41 = ssub.s32 1024, 1024
      %42 = vsyncadd [#allocation6], %s41
      %s43 = sshll.u32 [#allocation7], 4
      %s44 = int_to_ptr.vmem [resolvable:$true] %s43
      %49 = dma.hbm_to_vmem [thread:$0]  %s3, 1024, %s44, [#allocation6], 64, 64, 4
    $region17: #{tpu_custom_call.1} parent=1 // pred_fallthru
      _
    // Predicated region
    $region18: #{tpu_custom_call.1} parent=1 // pred_check
      _
    $region19: #{tpu_custom_call.1} parent=1 // pred_check_branch
      %51 = sbr.rel (0) target = $region21
    $region20: #{tpu_custom_call.1} parent=1 // pred_region
      %52 = dma.done [#allocation3], 128
    $region21: #{tpu_custom_call.1} parent=1 // pred_fallthru
      _
    // Predicated region
    $region22: #{tpu_custom_call.1} parent=1 // pred_check
      _
    $region23: #{tpu_custom_call.1} parent=1 // pred_check_branch
      %54 = sbr.rel (0) target = $region25
    $region24: #{tpu_custom_call.1} parent=1 // pred_region
      %55 = dma.done [#allocation6], 2048
    $region25: #{tpu_custom_call.1} parent=1 // pred_fallthru
      _
    // Predicated region
    $region26: #{tpu_custom_call.1} parent=1 // pred_check
      _
    $region27: #{tpu_custom_call.1} parent=1 // pred_check_branch
      %57 = sbr.rel (0) target = $region29
    $region28: #{tpu_custom_call.1} parent=1 // pred_region
      %58 = dma.done [#allocation6], 1024
    $region29: #{tpu_custom_call.1} parent=1 // pred_fallthru
      _
    %v60 = vld [vmem:[#allocation2] sm:$0xf]
    %v61 = vld [vmem:[#allocation2 + $0x4] sm:$0xf]
    %v62 = vld [vmem:[#allocation5] sm:$0xff]
    %v63 = vld [vmem:[#allocation5 + $0x8] sm:$0xff]
    %v64 = vld [vmem:[#allocation5 + $0x10] sm:$0xff]
    %v65 = vld [vmem:[#allocation5 + $0x18] sm:$0xff]
    %v66 = vld [vmem:[#allocation5 + $0x20] sm:$0xff]
    %v67 = vld [vmem:[#allocation5 + $0x28] sm:$0xff]
    %v68 = vld [vmem:[#allocation5 + $0x30] sm:$0xff]
    %v69 = vld [vmem:[#allocation5 + $0x38] sm:$0xff]
    %v70 = vld [vmem:[#allocation5 + $0x40] sm:$0xff]
    %v71 = vld [vmem:[#allocation5 + $0x48] sm:$0xff]
    %v72 = vld [vmem:[#allocation5 + $0x50] sm:$0xff]
    %v73 = vld [vmem:[#allocation5 + $0x58] sm:$0xff]
    %v74 = vld [vmem:[#allocation5 + $0x60] sm:$0xff]
    %v75 = vld [vmem:[#allocation5 + $0x68] sm:$0xff]
    %v76 = vld [vmem:[#allocation5 + $0x70] sm:$0xff]
    %v77 = vld [vmem:[#allocation5 + $0x78] sm:$0xff]
    %v78 = vld [vmem:[%s2] sm:$0x3]
    %v80 = vlaneseq
    %v81 = vshrl.u32 %v80, 7
    %v82 = vsub.s32 0, %v81
    %v83 = vrot.slane %v78, %v82
    %v84 = vlaneseq
    %v85 = vshrl.u32 %v84, 7
    %v86 = vsub.s32 1, %v85
    %v87 = vrot.slane %v78, %v86
    %v92 = vunpack.c.l.b16 %v60
    %v93 = vunpack.c.l.b16 %v61
    %v94 = vpack.c.b16 %v93, %v92
    %v112 = vunpack.c.l.b16 %v62
    %v113 = vunpack.c.h.b16 %v62
    %v114 = vunpack.c.l.b16 %v63
    %v115 = vunpack.c.h.b16 %v63
    %v116 = vunpack.c.l.b16 %v64
    %v117 = vunpack.c.h.b16 %v64
    %v118 = vunpack.c.l.b16 %v65
    %v119 = vunpack.c.h.b16 %v65
    %v120 = vunpack.c.l.b16 %v66
    %v121 = vunpack.c.h.b16 %v66
    %v122 = vunpack.c.l.b16 %v67
    %v123 = vunpack.c.h.b16 %v67
    %v124 = vunpack.c.l.b16 %v68
    %v125 = vunpack.c.h.b16 %v68
    %v126 = vunpack.c.l.b16 %v69
    %v127 = vunpack.c.h.b16 %v69
    %v128 = vunpack.c.l.b16 %v70
    %v129 = vunpack.c.h.b16 %v70
    %v130 = vunpack.c.l.b16 %v71
    %v131 = vunpack.c.h.b16 %v71
    %v132 = vunpack.c.l.b16 %v72
    %v133 = vunpack.c.h.b16 %v72
    %v134 = vunpack.c.l.b16 %v73
    %v135 = vunpack.c.h.b16 %v73
    %v136 = vunpack.c.l.b16 %v74
    %v137 = vunpack.c.h.b16 %v74
    %v138 = vunpack.c.l.b16 %v75
    %v139 = vunpack.c.h.b16 %v75
    %v140 = vunpack.c.l.b16 %v76
    %v141 = vunpack.c.h.b16 %v76
    %v142 = vunpack.c.l.b16 %v77
    %v143 = vunpack.c.h.b16 %v77
    %v144 = vpack.c.b16 %v114, %v112
    %v145 = vpack.c.b16 %v115, %v113
    %v146 = vpack.c.b16 %v118, %v116
    %v147 = vpack.c.b16 %v119, %v117
    %v148 = vpack.c.b16 %v122, %v120
    %v149 = vpack.c.b16 %v123, %v121
    %v150 = vpack.c.b16 %v126, %v124
    %v151 = vpack.c.b16 %v127, %v125
    %v152 = vpack.c.b16 %v130, %v128
    %v153 = vpack.c.b16 %v131, %v129
    %v154 = vpack.c.b16 %v134, %v132
    %v155 = vpack.c.b16 %v135, %v133
    %v156 = vpack.c.b16 %v138, %v136
    %v157 = vpack.c.b16 %v139, %v137
    %v158 = vpack.c.b16 %v142, %v140
    %v159 = vpack.c.b16 %v143, %v141
    %176 = vmatprep.subr.bf16.mxu0 %v145
    %177 = vmatpush1.bf16.msra.mxu0 %v144
    %178 = vmatprep.subr.bf16.mxu0 %v147
    %179 = vmatpush1.bf16.msra.mxu0 %v146
    %180 = vmatprep.subr.bf16.mxu0 %v149
    %181 = vmatpush1.bf16.msra.mxu0 %v148
    %182 = vmatprep.subr.bf16.mxu0 %v151
    %183 = vmatpush1.bf16.msra.mxu0 %v150
    %184 = vmatprep.subr.bf16.mxu0 %v153
    %185 = vmatpush1.bf16.msra.mxu0 %v152
    %186 = vmatprep.subr.bf16.mxu0 %v155
    %187 = vmatpush1.bf16.msra.mxu0 %v154
    %188 = vmatprep.subr.bf16.mxu0 %v157
    %189 = vmatpush1.bf16.msra.mxu0 %v156
    %190 = vmatprep.subr.bf16.mxu0 %v159
    %191 = vmatpush1.bf16.msra.mxu0 %v158
    %192 = vmatprep.subr.bf16.mxu0 0
    %193 = vmatpush1.bf16.msra.mxu0 0
    %194 = vmatprep.subr.bf16.mxu0 0
    %195 = vmatpush1.bf16.msra.mxu0 0
    %196 = vmatprep.subr.bf16.mxu0 0
    %197 = vmatpush1.bf16.msra.mxu0 0
    %198 = vmatprep.subr.bf16.mxu0 0
    %199 = vmatpush1.bf16.msra.mxu0 0
    %200 = vmatprep.subr.bf16.mxu0 0
    %201 = vmatpush1.bf16.msra.mxu0 0
    %202 = vmatprep.subr.bf16.mxu0 0
    %203 = vmatpush1.bf16.msra.mxu0 0
    %204 = vmatprep.subr.bf16.mxu0 0
    %205 = vmatpush1.bf16.msra.mxu0 0
    %206 = vmatprep.subr.bf16.mxu0 0
    %207 = vmatpush1.bf16.msra.mxu0 0
    %208 = vmatprep.mubr.bf16.mxu0 0
    %209 = vmatmul.mubr.bf16.gmra.mrb[0].mxu0 %v94
    %v210 = vpop.f32.mrb[0].mxu0
    %v211 = vadd.f32 %v83, %v210
    %v212 = vpop.f32.mrb[0].mxu0
    %v213 = vadd.f32 %v87, %v212
    %v214 = vpop.f32.mrb[0].mxu0
    %v215 = vadd.f32 %v83, %v214
    %v216 = vpop.f32.mrb[0].mxu0
    %v217 = vadd.f32 %v87, %v216
    %218 = vdwg.mxu0
    %v219 = vmul.f32 %v211, %v211
    %v220 = vmul.f32 %v215, %v215
    %221 = vadd.xlane.f32.xlu0 %v219
    %v222 = vpop.xlane.xlu0 %221
    %223 = vadd.xlane.f32.xlu0 %v220
    %v224 = vpop.xlane.xlu0 %223
    %v225 = vadd.f32 %v222, 1e-12
    %v226 = vadd.f32 %v224, 1e-12
    %v227 = vrsqrt.pop %v225
    %v228 = vrsqrt.pop %v226
    %v229 = vmul.f32 %v213, %v213
    %v230 = vmul.f32 %v217, %v217
    %231 = vadd.xlane.f32.xlu0 %v229
    %v232 = vpop.xlane.xlu0 %231
    %233 = vadd.xlane.f32.xlu0 %v230
    %v234 = vpop.xlane.xlu0 %233
    %v235 = vadd.f32 %v232, 1e-12
    %v236 = vadd.f32 %v234, 1e-12
    %v237 = vrsqrt.pop %v235
    %v238 = vrsqrt.pop %v236
    %v239 = vmul.f32 %v227, 0.5
    %v240 = vmul.f32 %v228, 0.5
    %v241 = vmul.f32 %v239, %v211
    %v242 = vmul.f32 %v240, %v215
    %v243 = vmul.f32 %v237, 0.5
    %v244 = vmul.f32 %v238, 0.5
    %v245 = vmul.f32 %v243, %v213
    %v246 = vmul.f32 %v244, %v217
    %v247 = vadd.f32 %v241, %v245
    %v248 = vadd.f32 %v242, %v246
    %v249 = vld [vmem:[#allocation7] sm:$0xf]
    %v250 = vld [vmem:[#allocation7 + $0x4] sm:$0xf]
    %v251 = vld [vmem:[#allocation7 + $0x8] sm:$0xf]
    %v252 = vld [vmem:[#allocation7 + $0xc] sm:$0xf]
    %v253 = vld [vmem:[#allocation7 + $0x10] sm:$0xf]
    %v254 = vld [vmem:[#allocation7 + $0x14] sm:$0xf]
    %v255 = vld [vmem:[#allocation7 + $0x18] sm:$0xf]
    %v256 = vld [vmem:[#allocation7 + $0x1c] sm:$0xf]
    %v257 = vld [vmem:[#allocation7 + $0x20] sm:$0xf]
    %v258 = vld [vmem:[#allocation7 + $0x24] sm:$0xf]
    %v259 = vld [vmem:[#allocation7 + $0x28] sm:$0xf]
    %v260 = vld [vmem:[#allocation7 + $0x2c] sm:$0xf]
    %v261 = vld [vmem:[#allocation7 + $0x30] sm:$0xf]
    %v262 = vld [vmem:[#allocation7 + $0x34] sm:$0xf]
    %v263 = vld [vmem:[#allocation7 + $0x38] sm:$0xf]
    %v264 = vld [vmem:[#allocation7 + $0x3c] sm:$0xf]
    %v265 = vpack.c.bf16 %v248, %v247
    %v282 = vunpack.c.l.b16 %v249
    %v283 = vunpack.c.l.b16 %v250
    %v284 = vunpack.c.l.b16 %v251
    %v285 = vunpack.c.l.b16 %v252
    %v286 = vunpack.c.l.b16 %v253
    %v287 = vunpack.c.l.b16 %v254
    %v288 = vunpack.c.l.b16 %v255
    %v289 = vunpack.c.l.b16 %v256
    %v290 = vunpack.c.l.b16 %v257
    %v291 = vunpack.c.l.b16 %v258
    %v292 = vunpack.c.l.b16 %v259
    %v293 = vunpack.c.l.b16 %v260
    %v294 = vunpack.c.l.b16 %v261
    %v295 = vunpack.c.l.b16 %v262
    %v296 = vunpack.c.l.b16 %v263
    %v297 = vunpack.c.l.b16 %v264
    %v298 = vpack.c.b16 %v283, %v282
    %v299 = vpack.c.b16 %v285, %v284
    %v300 = vpack.c.b16 %v287, %v286
    %v301 = vpack.c.b16 %v289, %v288
    %v302 = vpack.c.b16 %v291, %v290
    %v303 = vpack.c.b16 %v293, %v292
    %v304 = vpack.c.b16 %v295, %v294
    %v305 = vpack.c.b16 %v297, %v296
    %314 = vmatprep.subr.bf16.mxu0 0
    %315 = vmatpush1.bf16.msra.mxu0 %v298
    %316 = vmatprep.subr.bf16.mxu0 0
    %317 = vmatpush1.bf16.msra.mxu0 %v299
    %318 = vmatprep.subr.bf16.mxu0 0
    %319 = vmatpush1.bf16.msra.mxu0 %v300
    %320 = vmatprep.subr.bf16.mxu0 0
    %321 = vmatpush1.bf16.msra.mxu0 %v301
    %322 = vmatprep.subr.bf16.mxu0 0
    %323 = vmatpush1.bf16.msra.mxu0 %v302
    %324 = vmatprep.subr.bf16.mxu0 0
    %325 = vmatpush1.bf16.msra.mxu0 %v303
    %326 = vmatprep.subr.bf16.mxu0 0
    %327 = vmatpush1.bf16.msra.mxu0 %v304
    %328 = vmatprep.subr.bf16.mxu0 0
    %329 = vmatpush1.bf16.msra.mxu0 %v305
    %330 = vmatprep.subr.bf16.mxu0 0
    %331 = vmatpush1.bf16.msra.mxu0 0
    %332 = vmatprep.subr.bf16.mxu0 0
    %333 = vmatpush1.bf16.msra.mxu0 0
    %334 = vmatprep.subr.bf16.mxu0 0
    %335 = vmatpush1.bf16.msra.mxu0 0
    %336 = vmatprep.subr.bf16.mxu0 0
    %337 = vmatpush1.bf16.msra.mxu0 0
    %338 = vmatprep.subr.bf16.mxu0 0
    %339 = vmatpush1.bf16.msra.mxu0 0
    %340 = vmatprep.subr.bf16.mxu0 0
    %341 = vmatpush1.bf16.msra.mxu0 0
    %342 = vmatprep.subr.bf16.mxu0 0
    %343 = vmatpush1.bf16.msra.mxu0 0
    %344 = vmatprep.subr.bf16.mxu0 0
    %345 = vmatpush1.bf16.msra.mxu0 0
    %346 = vmatprep.mubr.bf16.mxu0 0
    %347 = vmatmul.mubr.bf16.gmra.mrb[0].mxu0 %v265
    %v348 = vpop.f32.mrb[0].mxu0
    %v349 = vadd.f32 0.0, %v348
    %v350 = vpop.f32.mrb[0].mxu0
    %v351 = vpop.f32.mrb[0].mxu0
    %v352 = vadd.f32 0.0, %v351
    %v353 = vpop.f32.mrb[0].mxu0
    %354 = vdwg.mxu0
    %355 = vst [vmem:[#allocation8] sm:$0xff] %v349
    %356 = vst [vmem:[#allocation8 + $0x8] sm:$0xff] %v352
    // Predicated region
    $region30: #{tpu_custom_call.1} parent=1 // pred_check
      _
    $region31: #{tpu_custom_call.1} parent=1 // pred_check_branch
      %358 = sbr.rel (0) target = $region33
    $region32: #{tpu_custom_call.1} parent=1 // pred_region
      %s360 = ssub.s32 256, 256
      %361 = vsyncadd [#allocation4], %s360
      %s362 = sshll.u32 [#allocation8], 4
      %s363 = int_to_ptr.vmem [resolvable:$true] %s362
      %368 = dma.vmem_to_hbm [thread:$0]  %s363, 256, %s4, [#allocation4], 128, 128, 8
    $region33: #{tpu_custom_call.1} parent=1 // pred_fallthru
      _
    // Predicated region
    $region34: #{tpu_custom_call.1} parent=1 // pred_check
      _
    $region35: #{tpu_custom_call.1} parent=1 // pred_check_branch
      %370 = sbr.rel (0) target = $region37
    $region36: #{tpu_custom_call.1} parent=1 // pred_region
      %371 = dma.done [#allocation4], 256
    $region37: #{tpu_custom_call.1} parent=1 // pred_fallthru
      _
    %372 = vsyncpa [#allocation3], 1
    %373 = vsyncpa [#allocation6], 1
    %374 = vsyncpa [#allocation4], 1

</llo_original>
